<compile_context>
chip_gen: v5e
topology: v5e:2x2
jax: 0.10.0
libtpu: 0.0.40
codegen_flags: <defaults>
</compile_context>

<pallas_src>
import numpy as np
import jax
import jax.numpy as jnp
from jax.experimental import pallas as pl
from jax.experimental.pallas import tpu as pltpu


# ----------------------------------------------------------------------------
# Fused Pallas kernel: all T S2V layers + Q readout
# ----------------------------------------------------------------------------
def qfun_kernel(deg_ref, pos_ref, neg_ref, x_ref, mu0_ref,
                w1s_ref, w2s_ref, w3s_ref, w4s_ref,
                w7_ref, w5p_ref, w5n_ref,
                q_ref, mu_sc):
    """Grid axis 0 = layer index t (sequential).

    deg/pos/neg : [N,1] per-node scalars (degree, sum relu(ew), sum relu(-ew))
    x           : [N,1] node tags
    mu0         : [N,Dpad] initial embedding (zero-padded to Dpad)
    w1s,w4s     : [1,1,H]    per-layer (t-indexed block)
    w2s         : [1,Dpad,H] per-layer (zero rows beyond the layer's true in-dim)
    w3s         : [1,H,H]    per-layer
    w7          : [H,H], w5p/w5n : [1,H] (two halves of lin5's weight)
    q           : [N,1] output (written only at t == T-1)
    mu_sc       : [N,Dpad] VMEM scratch holding mu across layers
    """
    t = pl.program_id(0)
    T = pl.num_programs(0)
    N, Dpad = mu_sc.shape
    H = w1s_ref.shape[-1]

    @pl.when(t == 0)
    def _():
        mu_sc[...] = mu0_ref[...]

    mu = mu_sc[...]                           # [N, Dpad]

    w1 = w1s_ref[0]                           # [1, H]
    w2 = w2s_ref[0]                           # [Dpad, H]
    w3 = w3s_ref[0]                           # [H, H]
    w4 = w4s_ref[0]                           # [1, H]

    # --- x branch: lin1 with K=1 -> VPU outer product (no MXU) ------------
    x_proj = x_ref[...] * w1                                        # [N, H]

    # --- mu branch: scatter_add(mu[dst], dst) == deg * mu, then lin2 ------
    mu_proj = jnp.dot(deg_ref[...] * mu, w2,
                      preferred_element_type=jnp.float32)           # [N, H]

    # --- edge branch: scatter_add(relu(ew@W4), dst) == pos⊗relu(w4)+neg⊗relu(-w4)
    ew_aggr = (pos_ref[...] * jnp.maximum(w4, 0.0)
               + neg_ref[...] * jnp.maximum(-w4, 0.0))               # [N, H]
    ew_proj = jnp.dot(ew_aggr, w3, preferred_element_type=jnp.float32)

    mu_new = jnp.maximum(x_proj + mu_proj + ew_proj, 0.0)            # [N, H]

    if Dpad == H:
        mu_sc[...] = mu_new
    else:
        mu_sc[:, :H] = mu_new  # padded cols are killed by zero rows of W2[t>0]

    # --- readout, fused on the last layer ---------------------------------
    @pl.when(t == T - 1)
    def _():
        nodes_vec = jnp.dot(mu_new, w7_ref[...],
                            preferred_element_type=jnp.float32)      # [N, H]
        pool = jnp.sum(mu_new, axis=0, keepdims=True)                # [1, H]
        # lin5(relu(cat([pool, nodes_vec]))) with W5 split into its two halves;
        # pooled term is identical for every node -> compute once as [1,1].
        q_pool = jnp.sum(jnp.maximum(pool, 0.0) * w5p_ref[...],
                         axis=-1, keepdims=True)                     # [1, 1]
        q_node = jnp.sum(jnp.maximum(nodes_vec, 0.0) * w5n_ref[...],
                         axis=-1, keepdims=True)                     # [N, 1]
        q_ref[...] = q_node + q_pool


# ----------------------------------------------------------------------------
# Wrapper
# ----------------------------------------------------------------------------
def q_fun_forward(params, mu0, node_tag, edge_w, edge_index):
    """Full Q_Fun.forward (no `batch` key path: sum-pool over all nodes)."""
    w1s, w2s, w3s, w4s = params["w1s"], params["w2s"], params["w3s"], params["w4s"]
    w7, w5 = params["w7"], params["w5"]
    T, _, H = w1s.shape
    Dpad = w2s.shape[1]
    N, in_dim = mu0.shape
    E = edge_w.shape[0]

    # Per-node scalar aggregates (O(E) preprocessing, layer-invariant).
    # TODO(synk): scatter over dynamic dst indices is done once here with
    # jax.ops.segment_sum; a scalar-prefetch Pallas scatter is possible for huge E.
    dst = edge_index[1]
    deg = jax.ops.segment_sum(jnp.ones((E,), jnp.float32), dst,
                              num_segments=N)[:, None]               # [N, 1]
    ew = edge_w[:, 0]
    pos = jax.ops.segment_sum(jnp.maximum(ew, 0.0), dst,
                              num_segments=N)[:, None]               # [N, 1]
    neg = jax.ops.segment_sum(jnp.maximum(-ew, 0.0), dst,
                              num_segments=N)[:, None]               # [N, 1]

    mu0_p = jnp.pad(mu0, ((0, 0), (0, Dpad - in_dim)))               # [N, Dpad]
    w5_pool = w5[:H, 0][None, :]                                     # [1, H]
    w5_node = w5[H:, 0][None, :]                                     # [1, H]

    q = pl.pallas_call(
        qfun_kernel,
        out_shape=jax.ShapeDtypeStruct((N, 1), jnp.float32),
        grid=(T,),
        in_specs=[
            pl.BlockSpec((N, 1), lambda t: (0, 0)),          # deg
            pl.BlockSpec((N, 1), lambda t: (0, 0)),          # pos
            pl.BlockSpec((N, 1), lambda t: (0, 0)),          # neg
            pl.BlockSpec((N, 1), lambda t: (0, 0)),          # node_tag
            pl.BlockSpec((N, Dpad), lambda t: (0, 0)),       # mu0
            pl.BlockSpec((1, 1, H), lambda t: (t, 0, 0)),    # w1s (per layer)
            pl.BlockSpec((1, Dpad, H), lambda t: (t, 0, 0)), # w2s (per layer)
            pl.BlockSpec((1, H, H), lambda t: (t, 0, 0)),    # w3s (per layer)
            pl.BlockSpec((1, 1, H), lambda t: (t, 0, 0)),    # w4s (per layer)
            pl.BlockSpec((H, H), lambda t: (0, 0)),          # w7
            pl.BlockSpec((1, H), lambda t: (0, 0)),          # w5 pool half
            pl.BlockSpec((1, H), lambda t: (0, 0)),          # w5 node half
        ],
        out_specs=pl.BlockSpec((N, 1), lambda t: (0, 0)),
        scratch_shapes=[pltpu.VMEM((N, Dpad), jnp.float32)],
        compiler_params=pltpu.CompilerParams(
            dimension_semantics=("arbitrary",)),  # layer axis is sequential
    )(deg, pos, neg, node_tag, mu0_p, w1s, w2s, w3s, w4s, w7, w5_pool, w5_node)
    return q[:, 0]                                                   # [N]


# ----------------------------------------------------------------------------
# Deterministic parameter init (PyTorch nn.Linear(bias=False) default init)
# ----------------------------------------------------------------------------
def _linear_w(key, in_dim, out_dim):
    bound = 1.0 / np.sqrt(in_dim)
    return jax.random.uniform(key, (in_dim, out_dim), jnp.float32, -bound, bound)


def init_params(key, in_dim, hid_dim, T):
    keys = jax.random.split(key, 4 * T + 2)
    Dpad = max(in_dim, hid_dim)
    w1s, w2s, w3s, w4s, raw = [], [], [], [], []
    ki = 0
    for t in range(T):
        din = in_dim if t == 0 else hid_dim
        w1 = _linear_w(keys[ki], 1, hid_dim); ki += 1
        w2 = _linear_w(keys[ki], din, hid_dim); ki += 1
        w3 = _linear_w(keys[ki], hid_dim, hid_dim); ki += 1
        w4 = _linear_w(keys[ki], 1, hid_dim); ki += 1
        w1s.append(w1)                                               # [1, H]
        w2s.append(jnp.pad(w2, ((0, Dpad - din), (0, 0))))           # [Dpad, H]
        w3s.append(w3)
        w4s.append(w4)
        raw.append((w1, w2, w3, w4))
    w7 = _linear_w(keys[ki], hid_dim, hid_dim); ki += 1
    w5 = _linear_w(keys[ki], 2 * hid_dim, 1)
    # lin6 exists in __init__ but is unused in forward()  # TODO(synk): unused lin6
    return {"w1s": jnp.stack(w1s), "w2s": jnp.stack(w2s),
            "w3s": jnp.stack(w3s), "w4s": jnp.stack(w4s),
            "w7": w7, "w5": w5, "s2v_raw": raw}


# ----------------------------------------------------------------------------
# Pure-JAX reference (faithful translation of the PyTorch forward)
# ----------------------------------------------------------------------------
def ref_forward(params, mu0, node_tag, edge_w, edge_index):
    N = mu0.shape[0]
    dst = edge_index[1]
    mu = mu0
    for (w1, w2, w3, w4) in params["s2v_raw"]:
        xp = node_tag @ w1
        mu_j = mu[dst]
        mu_aggr = jax.ops.segment_sum(mu_j, dst, num_segments=N) @ w2
        ew_h = jnp.maximum(edge_w @ w4, 0.0)
        ew_aggr = jax.ops.segment_sum(ew_h, dst, num_segments=N) @ w3
        mu = jnp.maximum(xp + mu_aggr + ew_aggr, 0.0)
    nodes_vec = mu @ params["w7"]
    pool = jnp.tile(jnp.sum(mu, axis=0, keepdims=True), (N, 1))
    cat = jnp.concatenate([pool, nodes_vec], axis=1)
    return jnp.squeeze(jnp.maximum(cat, 0.0) @ params["w5"], axis=-1)


# ----------------------------------------------------------------------------
if __name__ == "__main__":
    N, E = 8, 16                 # nodes, edges
    IN_DIM, HID_DIM, T = 4, 128, 2   # lane-dense hidden width (multiple of 128)

    key = jax.random.PRNGKey(0)
    k_mu, k_tag, k_ew, k_src, k_par = jax.random.split(key, 5)

    mu0 = jax.random.normal(k_mu, (N, IN_DIM), jnp.float32)
    node_tag = jax.random.normal(k_tag, (N, 1), jnp.float32)
    edge_w = jax.random.uniform(k_ew, (E, 1), jnp.float32, -1.0, 1.0)
    src = jax.random.randint(k_src, (E,), 0, N)
    dst = jnp.arange(E, dtype=jnp.int32) % N            # every node is a target
    edge_index = jnp.stack([src, dst], axis=0)          # [2, E]

    params = init_params(k_par, IN_DIM, HID_DIM, T)

    out = jax.block_until_ready(
        q_fun_forward(params, mu0, node_tag, edge_w, edge_index))
    ref = jax.block_until_ready(
        ref_forward(params, mu0, node_tag, edge_w, edge_index))

    np.testing.assert_allclose(np.asarray(out), np.asarray(ref),
                               rtol=5e-4, atol=5e-4)
    print("KERNEL_OK")
</pallas_src>

<mosaic_0001>
module attributes {stable_mosaic.version = 11 : i64} {
  func.func @qfun_kernel(%arg0: i32, %arg1: memref<8x1xf32, #tpu.memory_space<vmem>>, %arg2: memref<8x1xf32, #tpu.memory_space<vmem>>, %arg3: memref<8x1xf32, #tpu.memory_space<vmem>>, %arg4: memref<8x1xf32, #tpu.memory_space<vmem>>, %arg5: memref<8x128xf32, #tpu.memory_space<vmem>>, %arg6: memref<1x1x128xf32, #tpu.memory_space<vmem>>, %arg7: memref<1x128x128xf32, #tpu.memory_space<vmem>>, %arg8: memref<1x128x128xf32, #tpu.memory_space<vmem>>, %arg9: memref<1x1x128xf32, #tpu.memory_space<vmem>>, %arg10: memref<128x128xf32, #tpu.memory_space<vmem>>, %arg11: memref<1x128xf32, #tpu.memory_space<vmem>>, %arg12: memref<1x128xf32, #tpu.memory_space<vmem>>, %arg13: memref<8x1xf32, #tpu.memory_space<vmem>>, %arg14: memref<8x128xf32, #tpu.memory_space<vmem>>) attributes {dimension_semantics = [#tpu.dimension_semantics<arbitrary>], iteration_bounds = array<i64: 2>, scalar_prefetch = 0 : i64, scratch_operands = 1 : i64, tpu.core_type = #tpu.core_type<tc>, window_params = [{pipeline_mode = #tpu.pipeline_mode<synchronous>, transform_indices = @transform_0, window_bounds = array<i64: 8, 1>}, {pipeline_mode = #tpu.pipeline_mode<synchronous>, transform_indices = @transform_1, window_bounds = array<i64: 8, 1>}, {pipeline_mode = #tpu.pipeline_mode<synchronous>, transform_indices = @transform_2, window_bounds = array<i64: 8, 1>}, {pipeline_mode = #tpu.pipeline_mode<synchronous>, transform_indices = @transform_3, window_bounds = array<i64: 8, 1>}, {pipeline_mode = #tpu.pipeline_mode<synchronous>, transform_indices = @transform_4, window_bounds = array<i64: 8, 128>}, {transform_indices = @transform_5, window_bounds = array<i64: 1, 1, 128>}, {transform_indices = @transform_6, window_bounds = array<i64: 1, 128, 128>}, {transform_indices = @transform_7, window_bounds = array<i64: 1, 128, 128>}, {transform_indices = @transform_8, window_bounds = array<i64: 1, 1, 128>}, {pipeline_mode = #tpu.pipeline_mode<synchronous>, transform_indices = @transform_9, window_bounds = array<i64: 128, 128>}, {pipeline_mode = #tpu.pipeline_mode<synchronous>, transform_indices = @transform_10, window_bounds = array<i64: 1, 128>}, {pipeline_mode = #tpu.pipeline_mode<synchronous>, transform_indices = @transform_11, window_bounds = array<i64: 1, 128>}, {pipeline_mode = #tpu.pipeline_mode<synchronous>, transform_indices = @transform_12, window_bounds = array<i64: 8, 1>}]} {
    %c0_i32 = arith.constant 0 : i32
    %0 = arith.cmpi eq, %arg0, %c0_i32 : i32
    %1 = arith.extui %0 : i1 to i32
    %c0_i32_0 = arith.constant 0 : i32
    %2 = arith.cmpi ne, %1, %c0_i32_0 : i32
    scf.if %2 {
      %c0_30 = arith.constant 0 : index
      %c0_31 = arith.constant 0 : index
      %44 = vector.load %arg5[%c0_30, %c0_31] : memref<8x128xf32, #tpu.memory_space<vmem>>, vector<8x128xf32>
      %c0_32 = arith.constant 0 : index
      %c0_33 = arith.constant 0 : index
      %45 = vector.load %arg14[%c0_32, %c0_33] : memref<8x128xf32, #tpu.memory_space<vmem>>, vector<8x128xf32>
      tpu.vector_store %arg14[%c0_32, %c0_33], %44 {strides = array<i32>} : memref<8x128xf32, #tpu.memory_space<vmem>>, vector<8x128xf32>,
    } else {
    }
    %c0 = arith.constant 0 : index
    %c0_1 = arith.constant 0 : index
    %3 = vector.load %arg14[%c0, %c0_1] : memref<8x128xf32, #tpu.memory_space<vmem>>, vector<8x128xf32>
    %c0_2 = arith.constant 0 : index
    %c0_3 = arith.constant 0 : index
    %c0_4 = arith.constant 0 : index
    %4 = vector.load %arg6[%c0_2, %c0_3, %c0_4] : memref<1x1x128xf32, #tpu.memory_space<vmem>>, vector<1x1x128xf32>
    %5 = vector.shape_cast %4 : vector<1x1x128xf32> to vector<1x128xf32>
    %c0_5 = arith.constant 0 : index
    %c0_6 = arith.constant 0 : index
    %c0_7 = arith.constant 0 : index
    %6 = vector.load %arg7[%c0_5, %c0_6, %c0_7] : memref<1x128x128xf32, #tpu.memory_space<vmem>>, vector<1x128x128xf32>
    %7 = vector.shape_cast %6 : vector<1x128x128xf32> to vector<128x128xf32>
    %c0_8 = arith.constant 0 : index
    %c0_9 = arith.constant 0 : index
    %c0_10 = arith.constant 0 : index
    %8 = vector.load %arg8[%c0_8, %c0_9, %c0_10] : memref<1x128x128xf32, #tpu.memory_space<vmem>>, vector<1x128x128xf32>
    %9 = vector.shape_cast %8 : vector<1x128x128xf32> to vector<128x128xf32>
    %c0_11 = arith.constant 0 : index
    %c0_12 = arith.constant 0 : index
    %c0_13 = arith.constant 0 : index
    %10 = vector.load %arg9[%c0_11, %c0_12, %c0_13] : memref<1x1x128xf32, #tpu.memory_space<vmem>>, vector<1x1x128xf32>
    %11 = vector.shape_cast %10 : vector<1x1x128xf32> to vector<1x128xf32>
    %c0_14 = arith.constant 0 : index
    %c0_15 = arith.constant 0 : index
    %12 = vector.load %arg4[%c0_14, %c0_15] : memref<8x1xf32, #tpu.memory_space<vmem>>, vector<8x1xf32>
    %13 = vector.broadcast %12 : vector<8x1xf32> to vector<8x128xf32>
    %14 = vector.broadcast %5 : vector<1x128xf32> to vector<8x128xf32>
    %15 = arith.mulf %13, %14 : vector<8x128xf32>
    %c0_16 = arith.constant 0 : index
    %c0_17 = arith.constant 0 : index
    %16 = vector.load %arg1[%c0_16, %c0_17] : memref<8x1xf32, #tpu.memory_space<vmem>>, vector<8x1xf32>
    %17 = vector.broadcast %16 : vector<8x1xf32> to vector<8x128xf32>
    %18 = arith.mulf %17, %3 : vector<8x128xf32>
    %cst = arith.constant dense<0.000000e+00> : vector<8x128xf32>
    %19 = tpu.matmul %18, %7, %cst {dimension_numbers = #tpu.dot_dimension_numbers<[1], [0], [0], [1], [0, 0, 1, 1], [], []>} : vector<8x128xf32>, vector<128x128xf32>, vector<8x128xf32> -> vector<8x128xf32>
    %c0_18 = arith.constant 0 : index
    %c0_19 = arith.constant 0 : index
    %20 = vector.load %arg2[%c0_18, %c0_19] : memref<8x1xf32, #tpu.memory_space<vmem>>, vector<8x1xf32>
    %cst_20 = arith.constant 0.000000e+00 : f32
    %21 = vector.broadcast %cst_20 : f32 to vector<1x128xf32>
    %22 = arith.maximumf %11, %21 : vector<1x128xf32>
    %23 = vector.broadcast %20 : vector<8x1xf32> to vector<8x128xf32>
    %24 = vector.broadcast %22 : vector<1x128xf32> to vector<8x128xf32>
    %25 = arith.mulf %23, %24 : vector<8x128xf32>
    %c0_21 = arith.constant 0 : index
    %c0_22 = arith.constant 0 : index
    %26 = vector.load %arg3[%c0_21, %c0_22] : memref<8x1xf32, #tpu.memory_space<vmem>>, vector<8x1xf32>
    %cst_23 = arith.constant 0.000000e+00 : f32
    %27 = vector.broadcast %cst_23 : f32 to vector<1x128xf32>
    %28 = arith.subf %27, %11 : vector<1x128xf32>
    %cst_24 = arith.constant 0.000000e+00 : f32
    %29 = vector.broadcast %cst_24 : f32 to vector<1x128xf32>
    %30 = arith.maximumf %28, %29 : vector<1x128xf32>
    %31 = vector.broadcast %26 : vector<8x1xf32> to vector<8x128xf32>
    %32 = vector.broadcast %30 : vector<1x128xf32> to vector<8x128xf32>
    %33 = arith.mulf %31, %32 : vector<8x128xf32>
    %34 = arith.addf %25, %33 : vector<8x128xf32>
    %cst_25 = arith.constant dense<0.000000e+00> : vector<8x128xf32>
    %35 = tpu.matmul %34, %9, %cst_25 {dimension_numbers = #tpu.dot_dimension_numbers<[1], [0], [0], [1], [0, 0, 1, 1], [], []>} : vector<8x128xf32>, vector<128x128xf32>, vector<8x128xf32> -> vector<8x128xf32>
    %36 = arith.addf %15, %19 : vector<8x128xf32>
    %37 = arith.addf %36, %35 : vector<8x128xf32>
    %cst_26 = arith.constant 0.000000e+00 : f32
    %38 = vector.broadcast %cst_26 : f32 to vector<8x128xf32>
    %39 = arith.maximumf %37, %38 : vector<8x128xf32>
    %c0_27 = arith.constant 0 : index
    %c0_28 = arith.constant 0 : index
    %40 = vector.load %arg14[%c0_27, %c0_28] : memref<8x128xf32, #tpu.memory_space<vmem>>, vector<8x128xf32>
    tpu.vector_store %arg14[%c0_27, %c0_28], %39 {strides = array<i32>} : memref<8x128xf32, #tpu.memory_space<vmem>>, vector<8x128xf32>,
    %c1_i32 = arith.constant 1 : i32
    %41 = arith.cmpi eq, %arg0, %c1_i32 : i32
    %42 = arith.extui %41 : i1 to i32
    %c0_i32_29 = arith.constant 0 : i32
    %43 = arith.cmpi ne, %42, %c0_i32_29 : i32
    scf.if %43 {
      %c0_30 = arith.constant 0 : index
      %c0_31 = arith.constant 0 : index
      %44 = vector.load %arg10[%c0_30, %c0_31] : memref<128x128xf32, #tpu.memory_space<vmem>>, vector<128x128xf32>
      %cst_32 = arith.constant dense<0.000000e+00> : vector<8x128xf32>
      %45 = tpu.matmul %39, %44, %cst_32 {dimension_numbers = #tpu.dot_dimension_numbers<[1], [0], [0], [1], [0, 0, 1, 1], [], []>} : vector<8x128xf32>, vector<128x128xf32>, vector<8x128xf32> -> vector<8x128xf32>
      %cst_33 = arith.constant dense<0.000000e+00> : vector<128xf32>
      %46 = vector.multi_reduction <add>, %39, %cst_33 [0] : vector<8x128xf32> to vector<128xf32>
      %47 = vector.shape_cast %46 : vector<128xf32> to vector<1x128xf32>
      %cst_34 = arith.constant 0.000000e+00 : f32
      %48 = vector.broadcast %cst_34 : f32 to vector<1x128xf32>
      %49 = arith.maximumf %47, %48 : vector<1x128xf32>
      %c0_35 = arith.constant 0 : index
      %c0_36 = arith.constant 0 : index
      %50 = vector.load %arg11[%c0_35, %c0_36] : memref<1x128xf32, #tpu.memory_space<vmem>>, vector<1x128xf32>
      %51 = arith.mulf %49, %50 : vector<1x128xf32>
      %cst_37 = arith.constant dense<0.000000e+00> : vector<1xf32>
      %52 = vector.multi_reduction <add>, %51, %cst_37 [1] : vector<1x128xf32> to vector<1xf32>
      %53 = vector.shape_cast %52 : vector<1xf32> to vector<1x1xf32>
      %cst_38 = arith.constant 0.000000e+00 : f32
      %54 = vector.broadcast %cst_38 : f32 to vector<8x128xf32>
      %55 = arith.maximumf %45, %54 : vector<8x128xf32>
      %c0_39 = arith.constant 0 : index
      %c0_40 = arith.constant 0 : index
      %56 = vector.load %arg12[%c0_39, %c0_40] : memref<1x128xf32, #tpu.memory_space<vmem>>, vector<1x128xf32>
      %57 = vector.broadcast %56 : vector<1x128xf32> to vector<8x128xf32>
      %58 = arith.mulf %55, %57 : vector<8x128xf32>
      %cst_41 = arith.constant dense<0.000000e+00> : vector<8xf32>
      %59 = vector.multi_reduction <add>, %58, %cst_41 [1] : vector<8x128xf32> to vector<8xf32>
      %60 = vector.shape_cast %59 : vector<8xf32> to vector<8x1xf32>
      %61 = vector.broadcast %53 : vector<1x1xf32> to vector<8x1xf32>
      %62 = arith.addf %60, %61 : vector<8x1xf32>
      %c0_42 = arith.constant 0 : index
      %c0_43 = arith.constant 0 : index
      %63 = vector.load %arg13[%c0_42, %c0_43] : memref<8x1xf32, #tpu.memory_space<vmem>>, vector<8x1xf32>
      tpu.vector_store %arg13[%c0_42, %c0_43], %62 {strides = array<i32>} : memref<8x1xf32, #tpu.memory_space<vmem>>, vector<8x1xf32>,
    } else {
    }
    return
  }
  func.func @transform_0(%arg0: i32) -> (i32, i32) {
    %c0_i32 = arith.constant 0 : i32
    %c0_i32_0 = arith.constant 0 : i32
    %c0_i32_1 = arith.constant 0 : i32
    return %c0_i32, %c0_i32_0 : i32, i32
  }
  func.func @transform_1(%arg0: i32) -> (i32, i32) {
    %c0_i32 = arith.constant 0 : i32
    %c0_i32_0 = arith.constant 0 : i32
    %c0_i32_1 = arith.constant 0 : i32
    return %c0_i32, %c0_i32_0 : i32, i32
  }
  func.func @transform_2(%arg0: i32) -> (i32, i32) {
    %c0_i32 = arith.constant 0 : i32
    %c0_i32_0 = arith.constant 0 : i32
    %c0_i32_1 = arith.constant 0 : i32
    return %c0_i32, %c0_i32_0 : i32, i32
  }
  func.func @transform_3(%arg0: i32) -> (i32, i32) {
    %c0_i32 = arith.constant 0 : i32
    %c0_i32_0 = arith.constant 0 : i32
    %c0_i32_1 = arith.constant 0 : i32
    return %c0_i32, %c0_i32_0 : i32, i32
  }
  func.func @transform_4(%arg0: i32) -> (i32, i32) {
    %c0_i32 = arith.constant 0 : i32
    %c0_i32_0 = arith.constant 0 : i32
    %c0_i32_1 = arith.constant 0 : i32
    return %c0_i32, %c0_i32_0 : i32, i32
  }
  func.func @transform_5(%arg0: i32) -> (i32, i32, i32) {
    %c0_i32 = arith.constant 0 : i32
    %c0_i32_0 = arith.constant 0 : i32
    %c0_i32_1 = arith.constant 0 : i32
    return %arg0, %c0_i32, %c0_i32_0 : i32, i32, i32
  }
  func.func @transform_6(%arg0: i32) -> (i32, i32, i32) {
    %c0_i32 = arith.constant 0 : i32
    %c0_i32_0 = arith.constant 0 : i32
    %c0_i32_1 = arith.constant 0 : i32
    return %arg0, %c0_i32, %c0_i32_0 : i32, i32, i32
  }
  func.func @transform_7(%arg0: i32) -> (i32, i32, i32) {
    %c0_i32 = arith.constant 0 : i32
    %c0_i32_0 = arith.constant 0 : i32
    %c0_i32_1 = arith.constant 0 : i32
    return %arg0, %c0_i32, %c0_i32_0 : i32, i32, i32
  }
  func.func @transform_8(%arg0: i32) -> (i32, i32, i32) {
    %c0_i32 = arith.constant 0 : i32
    %c0_i32_0 = arith.constant 0 : i32
    %c0_i32_1 = arith.constant 0 : i32
    return %arg0, %c0_i32, %c0_i32_0 : i32, i32, i32
  }
  func.func @transform_9(%arg0: i32) -> (i32, i32) {
    %c0_i32 = arith.constant 0 : i32
    %c0_i32_0 = arith.constant 0 : i32
    %c0_i32_1 = arith.constant 0 : i32
    return %c0_i32, %c0_i32_0 : i32, i32
  }
  func.func @transform_10(%arg0: i32) -> (i32, i32) {
    %c0_i32 = arith.constant 0 : i32
    %c0_i32_0 = arith.constant 0 : i32
    %c0_i32_1 = arith.constant 0 : i32
    return %c0_i32, %c0_i32_0 : i32, i32
  }
  func.func @transform_11(%arg0: i32) -> (i32, i32) {
    %c0_i32 = arith.constant 0 : i32
    %c0_i32_0 = arith.constant 0 : i32
    %c0_i32_1 = arith.constant 0 : i32
    return %c0_i32, %c0_i32_0 : i32, i32
  }
  func.func @transform_12(%arg0: i32) -> (i32, i32) {
    %c0_i32 = arith.constant 0 : i32
    %c0_i32_0 = arith.constant 0 : i32
    %c0_i32_1 = arith.constant 0 : i32
    return %c0_i32, %c0_i32_0 : i32, i32
  }
}

</mosaic_0001>

<llo_original>
// kernel: tpu_custom_call.1
$region0: #{tpu_custom_call.1}
  #allocation0 [shape = 'u32[]', space=smem, size = 0x4, offset = 0x4, fixed_abs, tag = 'smem constant byte address 0x4 - core index']
  #allocation1 [shape = 'u32[72,128]{1,0:T(1,128)}', space=vmem, size = 0x9000, scoped, tag = 'internal scratch']
  #allocation2 [shape = 'f32[8,128]{1,0:T(8,128)}', space=vmem, size = 0x1000, scoped, tag = 'scratch operand']
  %s0 = inlined_call_operand.vmem [shape: f32[8,1], index: 0, kind: input, shape index: {}]
  %s1 = inlined_call_operand.vmem [shape: f32[8,1], index: 1, kind: input, shape index: {}]
  %s2 = inlined_call_operand.vmem [shape: f32[8,1], index: 2, kind: input, shape index: {}]
  %s3 = inlined_call_operand.vmem [shape: f32[8,1], index: 3, kind: input, shape index: {}]
  %s4 = inlined_call_operand.vmem [shape: f32[8,128], index: 4, kind: input, shape index: {}]
  %s5 = inlined_call_operand.vmem [shape: f32[2,1,128], index: 5, kind: input, shape index: {}]
  %s6 = inlined_call_operand.hbm [shape: f32[2,128,128], index: 6, kind: input, shape index: {}]
  %s7 = inlined_call_operand.hbm [shape: f32[2,128,128], index: 7, kind: input, shape index: {}]
  %s8 = inlined_call_operand.vmem [shape: f32[2,1,128], index: 8, kind: input, shape index: {}]
  %s9 = inlined_call_operand.hbm [shape: f32[128,128], index: 9, kind: input, shape index: {}]
  %s10 = inlined_call_operand.vmem [shape: f32[1,128], index: 10, kind: input, shape index: {}]
  %s11 = inlined_call_operand.vmem [shape: f32[1,128], index: 11, kind: input, shape index: {}]
  %s12 = inlined_call_operand.vmem [shape: f32[8,1], index: 12, kind: output, shape index: {}]
  %s13 = sld [smem:[#allocation0]]
  $region101: #{tpu_custom_call.1} parent=0
    _
  %s15 = ssub.s32 1, %s13
  %s16 = scalar_select 0, %s15, %s13
  $region1: #{tpu_custom_call.1} parent=0
    #allocation3 [shape = 'u8[131072]{0}', space=vmem, size = 0x20000, scoped, tag = 'input window, operand 6']
    #allocation4 [shape = 's32[2]{0}', space=sflag, size = 0x8, scoped, tag = 'scoped memory for tpu_custom_call.1']
    #allocation5 [shape = 'u8[131072]{0}', space=vmem, size = 0x20000, scoped, tag = 'input window, operand 7']
    #allocation6 [shape = 's32[2]{0}', space=sflag, size = 0x8, scoped, tag = 'scoped memory for tpu_custom_call.1']
    #allocation7 [shape = 'u8[65536]{0}', space=vmem, size = 0x10000, scoped, tag = 'input window, operand 9, single buffered']
    %17 = vsyncpa [#allocation4], 0
    %s18 = scalar_lea.sflag [#allocation4], 1
    %19 = vsyncpa %s18, 0
    %20 = vsyncpa [#allocation6], 0
    %s21 = scalar_lea.sflag [#allocation6], 1
    %22 = vsyncpa %s21, 0
    loop: start=0, step=1, limit=4
    $region2: #{tpu_custom_call.1} parent=1 // loop_pre_header
      _
    $region3: #{tpu_custom_call.1} parent=1 // loop_header
      %s24 = sphi 0, %s28
      %p25 = scmp.ge.s32.totalorder %s24, 4
      %s32 = sphi 0, %s32
      %s34 = sphi 0, %s32
      %s35 = sphi 0, %s34
      %s49 = sphi 0, %s35
      %s53 = sphi 0, %s53
      %s55 = sphi 0, %s53
      %s56 = sphi 0, %s55
      %s70 = sphi 0, %s56
      %s74 = sphi 0, %s74
      %s76 = sphi 0, %s74
      %s77 = sphi 0, %s76
      %s91 = sphi 0, %s77
      %s95 = sphi 0, %s95
      %s97 = sphi 0, %s95
      %s98 = sphi 0, %s97
      %s112 = sphi 0, %s98
      %s116 = sphi 0, %s116
      %s118 = sphi 0, %s116
      %s119 = sphi 0, %s118
      %s133 = sphi 0, %s119
      %s139 = sphi 0, %s141
      %s142 = sphi 0, %s139
      %s143 = sphi 0, %s142
      %s159 = sphi 0, %s143
      %s165 = sphi 0, %s167
      %s168 = sphi 0, %s165
      %s169 = sphi 0, %s168
      %s185 = sphi 0, %s169
      %s191 = sphi 0, %s193
      %s194 = sphi 0, %s191
      %s195 = sphi 0, %s194
      %s211 = sphi 0, %s195
      %s217 = sphi 0, %s219
      %s220 = sphi 0, %s217
      %s221 = sphi 0, %s220
      %s237 = sphi 0, %s221
      %s241 = sphi 0, %s241
      %s243 = sphi 0, %s241
      %s244 = sphi 0, %s243
      %s258 = sphi 0, %s244
      %s262 = sphi 0, %s262
      %s264 = sphi 0, %s262
      %s265 = sphi 0, %s264
      %s279 = sphi 0, %s265
      %s283 = sphi 0, %s283
      %s285 = sphi 0, %s283
      %s286 = sphi 0, %s285
      %s300 = sphi 0, %s286
      %s304 = sphi 0, %s304
      %s306 = sphi 0, %s304
      %s307 = sphi 0, %s306
      %s321 = sphi 0, %s307
    $region4: #{tpu_custom_call.1} parent=1 // loop_header_branch
      %27 = sbr.rel (%p25) target = $region8
    $region5: #{tpu_custom_call.1} parent=1 // loop_body
      %s29 = ssub.s32 %s24, 1
      %s30 = ssub.s32 %s24, 2
      %s31 = sadd.s32 %s24, 1
      %s33 = sadd.s32 %s32, 1
      %p36 = scmp.eq.s32.totalorder %s24, 1
      %p37 = scmp.ne.s32.totalorder %s32, %s34
      %p38 = scmp.eq.s32.totalorder %s24, 0
      %p39 = por %p37, %p38
      %p40 = scmp.ne.s32.totalorder %s32, %s34
      %p41 = scmp.eq.s32.totalorder %s29, 1
      %p42 = por %p40, %p41
      %p43 = scmp.ne.s32.totalorder %s34, %s35
      %p44 = scmp.eq.s32.totalorder %s29, 0
      %p45 = por %p43, %p44
      %p46 = scmp.ne.s32.totalorder %s34, %s35
      %p47 = scmp.eq.s32.totalorder %s30, 1
      %p48 = por %p46, %p47
      %p50 = scmp.ne.s32.totalorder %s35, %s49
      %p51 = scmp.eq.s32.totalorder %s30, 0
      %p52 = por %p50, %p51
      %s54 = sadd.s32 %s53, 1
      %p57 = scmp.eq.s32.totalorder %s24, 1
      %p58 = scmp.ne.s32.totalorder %s53, %s55
      %p59 = scmp.eq.s32.totalorder %s24, 0
      %p60 = por %p58, %p59
      %p61 = scmp.ne.s32.totalorder %s53, %s55
      %p62 = scmp.eq.s32.totalorder %s29, 1
      %p63 = por %p61, %p62
      %p64 = scmp.ne.s32.totalorder %s55, %s56
      %p65 = scmp.eq.s32.totalorder %s29, 0
      %p66 = por %p64, %p65
      %p67 = scmp.ne.s32.totalorder %s55, %s56
      %p68 = scmp.eq.s32.totalorder %s30, 1
      %p69 = por %p67, %p68
      %p71 = scmp.ne.s32.totalorder %s56, %s70
      %p72 = scmp.eq.s32.totalorder %s30, 0
      %p73 = por %p71, %p72
      %s75 = sadd.s32 %s74, 1
      %p78 = scmp.eq.s32.totalorder %s24, 1
      %p79 = scmp.ne.s32.totalorder %s74, %s76
      %p80 = scmp.eq.s32.totalorder %s24, 0
      %p81 = por %p79, %p80
      %p82 = scmp.ne.s32.totalorder %s74, %s76
      %p83 = scmp.eq.s32.totalorder %s29, 1
      %p84 = por %p82, %p83
      %p85 = scmp.ne.s32.totalorder %s76, %s77
      %p86 = scmp.eq.s32.totalorder %s29, 0
      %p87 = por %p85, %p86
      %p88 = scmp.ne.s32.totalorder %s76, %s77
      %p89 = scmp.eq.s32.totalorder %s30, 1
      %p90 = por %p88, %p89
      %p92 = scmp.ne.s32.totalorder %s77, %s91
      %p93 = scmp.eq.s32.totalorder %s30, 0
      %p94 = por %p92, %p93
      %s96 = sadd.s32 %s95, 1
      %p99 = scmp.eq.s32.totalorder %s24, 1
      %p100 = scmp.ne.s32.totalorder %s95, %s97
      %p101 = scmp.eq.s32.totalorder %s24, 0
      %p102 = por %p100, %p101
      %p103 = scmp.ne.s32.totalorder %s95, %s97
      %p104 = scmp.eq.s32.totalorder %s29, 1
      %p105 = por %p103, %p104
      %p106 = scmp.ne.s32.totalorder %s97, %s98
      %p107 = scmp.eq.s32.totalorder %s29, 0
      %p108 = por %p106, %p107
      %p109 = scmp.ne.s32.totalorder %s97, %s98
      %p110 = scmp.eq.s32.totalorder %s30, 1
      %p111 = por %p109, %p110
      %p113 = scmp.ne.s32.totalorder %s98, %s112
      %p114 = scmp.eq.s32.totalorder %s30, 0
      %p115 = por %p113, %p114
      %s117 = sadd.s32 %s116, 1
      %p120 = scmp.eq.s32.totalorder %s24, 1
      %p121 = scmp.ne.s32.totalorder %s116, %s118
      %p122 = scmp.eq.s32.totalorder %s24, 0
      %p123 = por %p121, %p122
      %p124 = scmp.ne.s32.totalorder %s116, %s118
      %p125 = scmp.eq.s32.totalorder %s29, 1
      %p126 = por %p124, %p125
      %p127 = scmp.ne.s32.totalorder %s118, %s119
      %p128 = scmp.eq.s32.totalorder %s29, 0
      %p129 = por %p127, %p128
      %p130 = scmp.ne.s32.totalorder %s118, %s119
      %p131 = scmp.eq.s32.totalorder %s30, 1
      %p132 = por %p130, %p131
      %p134 = scmp.ne.s32.totalorder %s119, %s133
      %p135 = scmp.eq.s32.totalorder %s30, 0
      %p136 = por %p134, %p135
      %s137 = ssub.s32 %s24, %s31
      %p138 = scmp.eq.s32.totalorder %s137, 0
      %s140 = sadd.s32 %s139, 1
      %s141 = scalar_select %p138, %s139, %s140
      %p144 = pneg %p138
      %p145 = scmp.eq.s32.totalorder %s24, 1
      %p146 = por %p144, %p145
      %p147 = scmp.ne.s32.totalorder %s139, %s142
      %p148 = scmp.eq.s32.totalorder %s24, 0
      %p149 = por %p147, %p148
      %p150 = scmp.ne.s32.totalorder %s139, %s142
      %p151 = scmp.eq.s32.totalorder %s29, 1
      %p152 = por %p150, %p151
      %p153 = scmp.ne.s32.totalorder %s142, %s143
      %p154 = scmp.eq.s32.totalorder %s29, 0
      %p155 = por %p153, %p154
      %p156 = scmp.ne.s32.totalorder %s142, %s143
      %p157 = scmp.eq.s32.totalorder %s30, 1
      %p158 = por %p156, %p157
      %p160 = scmp.ne.s32.totalorder %s143, %s159
      %p161 = scmp.eq.s32.totalorder %s30, 0
      %p162 = por %p160, %p161
      %s163 = ssub.s32 %s24, %s31
      %p164 = scmp.eq.s32.totalorder %s163, 0
      %s166 = sadd.s32 %s165, 1
      %s167 = scalar_select %p164, %s165, %s166
      %p170 = pneg %p164
      %p171 = scmp.eq.s32.totalorder %s24, 1
      %p172 = por %p170, %p171
      %p173 = scmp.ne.s32.totalorder %s165, %s168
      %p174 = scmp.eq.s32.totalorder %s24, 0
      %p175 = por %p173, %p174
      %p176 = scmp.ne.s32.totalorder %s165, %s168
      %p177 = scmp.eq.s32.totalorder %s29, 1
      %p178 = por %p176, %p177
      %p179 = scmp.ne.s32.totalorder %s168, %s169
      %p180 = scmp.eq.s32.totalorder %s29, 0
      %p181 = por %p179, %p180
      %p182 = scmp.ne.s32.totalorder %s168, %s169
      %p183 = scmp.eq.s32.totalorder %s30, 1
      %p184 = por %p182, %p183
      %p186 = scmp.ne.s32.totalorder %s169, %s185
      %p187 = scmp.eq.s32.totalorder %s30, 0
      %p188 = por %p186, %p187
      %s189 = ssub.s32 %s24, %s31
      %p190 = scmp.eq.s32.totalorder %s189, 0
      %s192 = sadd.s32 %s191, 1
      %s193 = scalar_select %p190, %s191, %s192
      %p196 = pneg %p190
      %p197 = scmp.eq.s32.totalorder %s24, 1
      %p198 = por %p196, %p197
      %p199 = scmp.ne.s32.totalorder %s191, %s194
      %p200 = scmp.eq.s32.totalorder %s24, 0
      %p201 = por %p199, %p200
      %p202 = scmp.ne.s32.totalorder %s191, %s194
      %p203 = scmp.eq.s32.totalorder %s29, 1
      %p204 = por %p202, %p203
      %p205 = scmp.ne.s32.totalorder %s194, %s195
      %p206 = scmp.eq.s32.totalorder %s29, 0
      %p207 = por %p205, %p206
      %p208 = scmp.ne.s32.totalorder %s194, %s195
      %p209 = scmp.eq.s32.totalorder %s30, 1
      %p210 = por %p208, %p209
      %p212 = scmp.ne.s32.totalorder %s195, %s211
      %p213 = scmp.eq.s32.totalorder %s30, 0
      %p214 = por %p212, %p213
      %s215 = ssub.s32 %s24, %s31
      %p216 = scmp.eq.s32.totalorder %s215, 0
      %s218 = sadd.s32 %s217, 1
      %s219 = scalar_select %p216, %s217, %s218
      %p222 = pneg %p216
      %p223 = scmp.eq.s32.totalorder %s24, 1
      %p224 = por %p222, %p223
      %p225 = scmp.ne.s32.totalorder %s217, %s220
      %p226 = scmp.eq.s32.totalorder %s24, 0
      %p227 = por %p225, %p226
      %p228 = scmp.ne.s32.totalorder %s217, %s220
      %p229 = scmp.eq.s32.totalorder %s29, 1
      %p230 = por %p228, %p229
      %p231 = scmp.ne.s32.totalorder %s220, %s221
      %p232 = scmp.eq.s32.totalorder %s29, 0
      %p233 = por %p231, %p232
      %p234 = scmp.ne.s32.totalorder %s220, %s221
      %p235 = scmp.eq.s32.totalorder %s30, 1
      %p236 = por %p234, %p235
      %p238 = scmp.ne.s32.totalorder %s221, %s237
      %p239 = scmp.eq.s32.totalorder %s30, 0
      %p240 = por %p238, %p239
      %s242 = sadd.s32 %s241, 1
      %p245 = scmp.eq.s32.totalorder %s24, 1
      %p246 = scmp.ne.s32.totalorder %s241, %s243
      %p247 = scmp.eq.s32.totalorder %s24, 0
      %p248 = por %p246, %p247
      %p249 = scmp.ne.s32.totalorder %s241, %s243
      %p250 = scmp.eq.s32.totalorder %s29, 1
      %p251 = por %p249, %p250
      %p252 = scmp.ne.s32.totalorder %s243, %s244
      %p253 = scmp.eq.s32.totalorder %s29, 0
      %p254 = por %p252, %p253
      %p255 = scmp.ne.s32.totalorder %s243, %s244
      %p256 = scmp.eq.s32.totalorder %s30, 1
      %p257 = por %p255, %p256
      %p259 = scmp.ne.s32.totalorder %s244, %s258
      %p260 = scmp.eq.s32.totalorder %s30, 0
      %p261 = por %p259, %p260
      %s263 = sadd.s32 %s262, 1
      %p266 = scmp.eq.s32.totalorder %s24, 1
      %p267 = scmp.ne.s32.totalorder %s262, %s264
      %p268 = scmp.eq.s32.totalorder %s24, 0
      %p269 = por %p267, %p268
      %p270 = scmp.ne.s32.totalorder %s262, %s264
      %p271 = scmp.eq.s32.totalorder %s29, 1
      %p272 = por %p270, %p271
      %p273 = scmp.ne.s32.totalorder %s264, %s265
      %p274 = scmp.eq.s32.totalorder %s29, 0
      %p275 = por %p273, %p274
      %p276 = scmp.ne.s32.totalorder %s264, %s265
      %p277 = scmp.eq.s32.totalorder %s30, 1
      %p278 = por %p276, %p277
      %p280 = scmp.ne.s32.totalorder %s265, %s279
      %p281 = scmp.eq.s32.totalorder %s30, 0
      %p282 = por %p280, %p281
      %s284 = sadd.s32 %s283, 1
      %p287 = scmp.eq.s32.totalorder %s24, 1
      %p288 = scmp.ne.s32.totalorder %s283, %s285
      %p289 = scmp.eq.s32.totalorder %s24, 0
      %p290 = por %p288, %p289
      %p291 = scmp.ne.s32.totalorder %s283, %s285
      %p292 = scmp.eq.s32.totalorder %s29, 1
      %p293 = por %p291, %p292
      %p294 = scmp.ne.s32.totalorder %s285, %s286
      %p295 = scmp.eq.s32.totalorder %s29, 0
      %p296 = por %p294, %p295
      %p297 = scmp.ne.s32.totalorder %s285, %s286
      %p298 = scmp.eq.s32.totalorder %s30, 1
      %p299 = por %p297, %p298
      %p301 = scmp.ne.s32.totalorder %s286, %s300
      %p302 = scmp.eq.s32.totalorder %s30, 0
      %p303 = por %p301, %p302
      %s305 = sadd.s32 %s304, 1
      %p308 = scmp.eq.s32.totalorder %s24, 1
      %p309 = scmp.ne.s32.totalorder %s304, %s306
      %p310 = scmp.eq.s32.totalorder %s24, 0
      %p311 = por %p309, %p310
      %p312 = scmp.ne.s32.totalorder %s304, %s306
      %p313 = scmp.eq.s32.totalorder %s29, 1
      %p314 = por %p312, %p313
      %p315 = scmp.ne.s32.totalorder %s306, %s307
      %p316 = scmp.eq.s32.totalorder %s29, 0
      %p317 = por %p315, %p316
      %p318 = scmp.ne.s32.totalorder %s306, %s307
      %p319 = scmp.eq.s32.totalorder %s30, 1
      %p320 = por %p318, %p319
      %p322 = scmp.ne.s32.totalorder %s307, %s321
      %p323 = scmp.eq.s32.totalorder %s30, 0
      %p324 = por %p322, %p323
      %p325 = scmp.le.s32.totalorder 1, %s24
      %p326 = scmp.lt.s32.totalorder %s24, 3
      %p327 = pnand %p325, %p326
      %p328 = pneg %p327
      // Predicated region
      $region9: #{tpu_custom_call.1} parent=5 // pred_check
        _
      $region10: #{tpu_custom_call.1} parent=5 // pred_check_branch
        %330 = sbr.rel (%p327) target = $region12
      $region11: #{tpu_custom_call.1} parent=5 // pred_region
        %s331 = ssub.s32 %s24, 1
        // Predicated region
        $region13: #{tpu_custom_call.1} parent=11 // pred_check
          %p332 = pneg %p45
        $region14: #{tpu_custom_call.1} parent=11 // pred_check_branch
          %334 = sbr.rel (%p332) target = $region16
        $region15: #{tpu_custom_call.1} parent=11 // pred_region
          _
        $region16: #{tpu_custom_call.1} parent=11 // pred_fallthru
          _
        // Predicated region
        $region17: #{tpu_custom_call.1} parent=11 // pred_check
          %p335 = pneg %p66
        $region18: #{tpu_custom_call.1} parent=11 // pred_check_branch
          %337 = sbr.rel (%p335) target = $region20
        $region19: #{tpu_custom_call.1} parent=11 // pred_region
          _
        $region20: #{tpu_custom_call.1} parent=11 // pred_fallthru
          _
        // Predicated region
        $region21: #{tpu_custom_call.1} parent=11 // pred_check
          %p338 = pneg %p87
        $region22: #{tpu_custom_call.1} parent=11 // pred_check_branch
          %340 = sbr.rel (%p338) target = $region24
        $region23: #{tpu_custom_call.1} parent=11 // pred_region
          _
        $region24: #{tpu_custom_call.1} parent=11 // pred_fallthru
          _
        // Predicated region
        $region25: #{tpu_custom_call.1} parent=11 // pred_check
          %p341 = pneg %p108
        $region26: #{tpu_custom_call.1} parent=11 // pred_check_branch
          %343 = sbr.rel (%p341) target = $region28
        $region27: #{tpu_custom_call.1} parent=11 // pred_region
          _
        $region28: #{tpu_custom_call.1} parent=11 // pred_fallthru
          _
        // Predicated region
        $region29: #{tpu_custom_call.1} parent=11 // pred_check
          %p344 = pneg %p129
        $region30: #{tpu_custom_call.1} parent=11 // pred_check_branch
          %346 = sbr.rel (%p344) target = $region32
        $region31: #{tpu_custom_call.1} parent=11 // pred_region
          _
        $region32: #{tpu_custom_call.1} parent=11 // pred_fallthru
          _
        // Predicated region
        $region33: #{tpu_custom_call.1} parent=11 // pred_check
          %p347 = pneg %p254
        $region34: #{tpu_custom_call.1} parent=11 // pred_check_branch
          %349 = sbr.rel (%p347) target = $region36
        $region35: #{tpu_custom_call.1} parent=11 // pred_region
          %351 = vsyncadd [#allocation6], 0
          %s352 = sshll.u32 %s9, 4
          %s353 = int_to_ptr.hbm [resolvable:$true] %s352
          %s354 = sshll.u32 [#allocation7], 4
          %s355 = int_to_ptr.vmem [resolvable:$true] %s354
          %360 = dma.hbm_to_vmem [thread:$0]  %s353, 2048, %s355, [#allocation6], 128, 128, 8
        $region36: #{tpu_custom_call.1} parent=11 // pred_fallthru
          _
        // Predicated region
        $region37: #{tpu_custom_call.1} parent=11 // pred_check
          %p361 = pneg %p275
        $region38: #{tpu_custom_call.1} parent=11 // pred_check_branch
          %363 = sbr.rel (%p361) target = $region40
        $region39: #{tpu_custom_call.1} parent=11 // pred_region
          _
        $region40: #{tpu_custom_call.1} parent=11 // pred_fallthru
          _
        // Predicated region
        $region41: #{tpu_custom_call.1} parent=11 // pred_check
          %p364 = pneg %p296
        $region42: #{tpu_custom_call.1} parent=11 // pred_check_branch
          %366 = sbr.rel (%p364) target = $region44
        $region43: #{tpu_custom_call.1} parent=11 // pred_region
          _
        $region44: #{tpu_custom_call.1} parent=11 // pred_fallthru
          _
      $region12: #{tpu_custom_call.1} parent=5 // pred_fallthru
        _
      %p367 = scmp.lt.s32.totalorder %s24, 2
      // Predicated region
      $region45: #{tpu_custom_call.1} parent=5 // pred_check
        %p368 = pneg %p367
      $region46: #{tpu_custom_call.1} parent=5 // pred_check_branch
        %370 = sbr.rel (%p368) target = $region48
      $region47: #{tpu_custom_call.1} parent=5 // pred_region
        // Predicated region
        $region49: #{tpu_custom_call.1} parent=47 // pred_check
          %p371 = pneg %p149
        $region50: #{tpu_custom_call.1} parent=47 // pred_check_branch
          %373 = sbr.rel (%p371) target = $region52
        $region51: #{tpu_custom_call.1} parent=47 // pred_region
          %p374 = scmp.lt.s32.totalorder %s24, 1
          %s375 = scalar_select %p374, %s24, 1
          %s376 = scalar_lea.vmem %s5, %s375
        $region52: #{tpu_custom_call.1} parent=47 // pred_fallthru
          _
        // Predicated region
        $region53: #{tpu_custom_call.1} parent=47 // pred_check
          %p377 = pneg %p175
        $region54: #{tpu_custom_call.1} parent=47 // pred_check_branch
          %379 = sbr.rel (%p377) target = $region56
        $region55: #{tpu_custom_call.1} parent=47 // pred_region
          %s380 = sand.u32 %s165, 1
          %s381 = scalar_lea.sflag [#allocation4], %s380
          %s382 = sand.u32 %s165, 1
          %s383 = smul.addr %s382, 128
          %s384 = scalar_lea.vmem [#allocation3], %s383
          %386 = vsyncadd %s381, 0
          %s387 = smul.addr %s24, 16
          %s388 = smul.addr %s387, 8
          %s389 = scalar_lea.hbm %s6, %s388
          %s390 = sshll.u32 %s389, 4
          %s391 = int_to_ptr.hbm [resolvable:$true] %s390
          %s392 = sshll.u32 %s384, 4
          %s393 = int_to_ptr.vmem [resolvable:$true] %s392
          %398 = dma.hbm_to_vmem [thread:$0]  %s391, 2048, %s393, %s381, 128, 128, 8
        $region56: #{tpu_custom_call.1} parent=47 // pred_fallthru
          _
        // Predicated region
        $region57: #{tpu_custom_call.1} parent=47 // pred_check
          %p399 = pneg %p201
        $region58: #{tpu_custom_call.1} parent=47 // pred_check_branch
          %401 = sbr.rel (%p399) target = $region60
        $region59: #{tpu_custom_call.1} parent=47 // pred_region
          %s402 = sand.u32 %s24, 1
          %s403 = scalar_lea.sflag [#allocation6], %s402
          %s404 = sand.u32 %s191, 1
          %s405 = smul.addr %s404, 128
          %s406 = scalar_lea.vmem [#allocation5], %s405
          %408 = vsyncadd %s403, 0
          %s409 = smul.addr %s24, 16
          %s410 = smul.addr %s409, 8
          %s411 = scalar_lea.hbm %s7, %s410
          %s412 = sshll.u32 %s411, 4
          %s413 = int_to_ptr.hbm [resolvable:$true] %s412
          %s414 = sshll.u32 %s406, 4
          %s415 = int_to_ptr.vmem [resolvable:$true] %s414
          %420 = dma.hbm_to_vmem [thread:$0]  %s413, 2048, %s415, %s403, 128, 128, 8
        $region60: #{tpu_custom_call.1} parent=47 // pred_fallthru
          _
        // Predicated region
        $region61: #{tpu_custom_call.1} parent=47 // pred_check
          %p421 = pneg %p227
        $region62: #{tpu_custom_call.1} parent=47 // pred_check_branch
          %423 = sbr.rel (%p421) target = $region64
        $region63: #{tpu_custom_call.1} parent=47 // pred_region
          %p424 = scmp.lt.s32.totalorder %s24, 1
          %s425 = scalar_select %p424, %s24, 1
          %s426 = scalar_lea.vmem %s8, %s425
        $region64: #{tpu_custom_call.1} parent=47 // pred_fallthru
          _
      $region48: #{tpu_custom_call.1} parent=5 // pred_fallthru
        _
      %p427 = scmp.le.s32.totalorder 1, %s24
      %p428 = scmp.lt.s32.totalorder %s24, 3
      %p429 = pnand %p427, %p428
      %p430 = pneg %p429
      // Predicated region
      $region65: #{tpu_custom_call.1} parent=5 // pred_check
        _
      $region66: #{tpu_custom_call.1} parent=5 // pred_check_branch
        %432 = sbr.rel (%p429) target = $region68
      $region67: #{tpu_custom_call.1} parent=5 // pred_region
        %s433 = ssub.s32 %s24, 1
        %s434 = sand.u32 %s168, 1
        %s435 = scalar_lea.sflag [#allocation4], %s434
        %s436 = sand.u32 %s168, 1
        %s437 = smul.addr %s436, 128
        %s438 = scalar_lea.vmem [#allocation3], %s437
        // Predicated region
        $region69: #{tpu_custom_call.1} parent=67 // pred_check
          %p439 = pneg %p181
        $region70: #{tpu_custom_call.1} parent=67 // pred_check_branch
          %441 = sbr.rel (%p439) target = $region72
        $region71: #{tpu_custom_call.1} parent=67 // pred_region
          %443 = dma.done %s435, 2048
        $region72: #{tpu_custom_call.1} parent=67 // pred_fallthru
          _
        %s444 = sand.u32 %s29, 1
        %s445 = scalar_lea.sflag [#allocation6], %s444
        %s446 = sand.u32 %s194, 1
        %s447 = smul.addr %s446, 128
        %s448 = scalar_lea.vmem [#allocation5], %s447
        // Predicated region
        $region73: #{tpu_custom_call.1} parent=67 // pred_check
          %p449 = pneg %p207
        $region74: #{tpu_custom_call.1} parent=67 // pred_check_branch
          %451 = sbr.rel (%p449) target = $region76
        $region75: #{tpu_custom_call.1} parent=67 // pred_region
          %453 = dma.done %s445, 2048
        $region76: #{tpu_custom_call.1} parent=67 // pred_fallthru
          _
        // Predicated region
        $region77: #{tpu_custom_call.1} parent=67 // pred_check
          %p454 = pneg %p254
        $region78: #{tpu_custom_call.1} parent=67 // pred_check_branch
          %456 = sbr.rel (%p454) target = $region80
        $region79: #{tpu_custom_call.1} parent=67 // pred_region
          %458 = dma.done [#allocation6], 2048
        $region80: #{tpu_custom_call.1} parent=67 // pred_fallthru
          _
        %p459 = pneg %p45
        %p460 = pneg %p42
        %p461 = pneg %p66
        %p462 = pneg %p63
        %p463 = pneg %p87
        %p464 = pneg %p84
        %p465 = pneg %p108
        %p466 = pneg %p105
        %p467 = pneg %p129
        %p468 = pneg %p126
        %p469 = scmp.lt.s32.totalorder %s29, 1
        %s470 = scalar_select %p469, %s29, 1
        %s471 = scalar_lea.vmem %s5, %s470
        %p472 = pneg %p155
        %p473 = pneg %p152
        %s474 = sand.u32 %s168, 1
        %s475 = scalar_lea.sflag [#allocation4], %s474
        %s476 = sand.u32 %s168, 1
        %s477 = smul.addr %s476, 128
        %s478 = scalar_lea.vmem [#allocation3], %s477
        %p479 = pneg %p181
        %p480 = pneg %p178
        %s481 = sand.u32 %s29, 1
        %s482 = scalar_lea.sflag [#allocation6], %s481
        %s483 = sand.u32 %s194, 1
        %s484 = smul.addr %s483, 128
        %s485 = scalar_lea.vmem [#allocation5], %s484
        %p486 = pneg %p207
        %p487 = pneg %p204
        %p488 = scmp.lt.s32.totalorder %s29, 1
        %s489 = scalar_select %p488, %s29, 1
        %s490 = scalar_lea.vmem %s8, %s489
        %p491 = pneg %p233
        %p492 = pneg %p230
        %p493 = pneg %p254
        %p494 = pneg %p251
        %p495 = pneg %p275
        %p496 = pneg %p272
        %p497 = pneg %p296
        %p498 = pneg %p293
        %p499 = pneg %p317
        %p500 = pneg %p314
        %p501 = scmp.lt.s32.totalorder %s29, 1
        %s502 = scalar_select %p501, %s29, 1
        %s503 = scalar_lea.vmem %s5, %s502
        %p504 = scmp.lt.s32.totalorder %s29, 1
        %s505 = scalar_select %p504, %s29, 1
        %s506 = scalar_lea.vmem %s8, %s505
        %p507 = scmp.eq.s32.totalorder %s29, 0
        // Predicated region
        $region81: #{tpu_custom_call.1} parent=67 // pred_check
          %p508 = pneg %p507
        $region82: #{tpu_custom_call.1} parent=67 // pred_check_branch
          %510 = sbr.rel (%p508) target = $region84
        $region83: #{tpu_custom_call.1} parent=67 // pred_region
          %v511 = vld [vmem:[%s4] sm:$0xff]
          %512 = vst [vmem:[#allocation2] sm:$0xff] %v511
        $region84: #{tpu_custom_call.1} parent=67 // pred_fallthru
          _
        %v513 = vld [vmem:[#allocation2] sm:$0xff]
        %v514 = vld [vmem:[%s503] sm:$0x1]
        %v515 = vld [vmem:[%s438] sm:$0xff]
        %v516 = vld [vmem:[%s438 + $0x8] sm:$0xff]
        %v517 = vld [vmem:[%s438 + $0x10] sm:$0xff]
        %v518 = vld [vmem:[%s438 + $0x18] sm:$0xff]
        %v519 = vld [vmem:[%s438 + $0x20] sm:$0xff]
        %v520 = vld [vmem:[%s438 + $0x28] sm:$0xff]
        %v521 = vld [vmem:[%s438 + $0x30] sm:$0xff]
        %v522 = vld [vmem:[%s438 + $0x38] sm:$0xff]
        %v523 = vld [vmem:[%s438 + $0x40] sm:$0xff]
        %v524 = vld [vmem:[%s438 + $0x48] sm:$0xff]
        %v525 = vld [vmem:[%s438 + $0x50] sm:$0xff]
        %v526 = vld [vmem:[%s438 + $0x58] sm:$0xff]
        %v527 = vld [vmem:[%s438 + $0x60] sm:$0xff]
        %v528 = vld [vmem:[%s438 + $0x68] sm:$0xff]
        %v529 = vld [vmem:[%s438 + $0x70] sm:$0xff]
        %v530 = vld [vmem:[%s438 + $0x78] sm:$0xff]
        %v531 = vld [vmem:[%s448] sm:$0xff]
        %v532 = vld [vmem:[%s448 + $0x8] sm:$0xff]
        %v533 = vld [vmem:[%s448 + $0x10] sm:$0xff]
        %v534 = vld [vmem:[%s448 + $0x18] sm:$0xff]
        %v535 = vld [vmem:[%s448 + $0x20] sm:$0xff]
        %v536 = vld [vmem:[%s448 + $0x28] sm:$0xff]
        %v537 = vld [vmem:[%s448 + $0x30] sm:$0xff]
        %v538 = vld [vmem:[%s448 + $0x38] sm:$0xff]
        %v539 = vld [vmem:[%s448 + $0x40] sm:$0xff]
        %v540 = vld [vmem:[%s448 + $0x48] sm:$0xff]
        %v541 = vld [vmem:[%s448 + $0x50] sm:$0xff]
        %v542 = vld [vmem:[%s448 + $0x58] sm:$0xff]
        %v543 = vld [vmem:[%s448 + $0x60] sm:$0xff]
        %v544 = vld [vmem:[%s448 + $0x68] sm:$0xff]
        %v545 = vld [vmem:[%s448 + $0x70] sm:$0xff]
        %v546 = vld [vmem:[%s448 + $0x78] sm:$0xff]
        %v547 = vld [vmem:[%s506] sm:$0x1]
        %v548 = vld [vmem:[%s3] sm:$0xff]
        %550 = vset.pattern.permute.xlu0 0
        %551 = vperm.xlu0 %550, %v548
        %v552 = vpop.permute.xlu0 %551
        %v555 = vperm.slane %v514, 0
        %v557 = vmul.f32 %v552, %v555
        %v558 = vld [vmem:[%s0] sm:$0xff]
        %560 = vset.pattern.permute.xlu0 0
        %561 = vperm.xlu0 %560, %v558
        %v562 = vpop.permute.xlu0 %561
        %v564 = vmul.f32 %v562, %v513
        %565 = vmatpush.msra.mxu0 %v530
        %566 = vmatpush.msra.mxu0 %v529
        %567 = vmatpush.msra.mxu0 %v528
        %568 = vmatpush.msra.mxu0 %v527
        %569 = vmatpush.msra.mxu0 %v526
        %570 = vmatpush.msra.mxu0 %v525
        %571 = vmatpush.msra.mxu0 %v524
        %572 = vmatpush.msra.mxu0 %v523
        %573 = vmatpush.msra.mxu0 %v522
        %574 = vmatpush.msra.mxu0 %v521
        %575 = vmatpush.msra.mxu0 %v520
        %576 = vmatpush.msra.mxu0 %v519
        %577 = vmatpush.msra.mxu0 %v518
        %578 = vmatpush.msra.mxu0 %v517
        %579 = vmatpush.msra.mxu0 %v516
        %580 = vmatpush.msra.mxu0 %v515
        %581 = vmatmul.f32.gmra.mxu0 %v564
        %v582 = vpop.f32.mrf.mxu0
        %v583 = vadd.f32 0.0, %v582
        %584 = vdwg.mxu0
        %v585 = vld [vmem:[%s1] sm:$0xff]
        %v586 = vmax.f32 %v547, 0.0
        %588 = vset.pattern.permute.xlu0 0
        %589 = vperm.xlu0 %588, %v585
        %v590 = vpop.permute.xlu0 %589
        %v593 = vperm.slane %v586, 0
        %v595 = vmul.f32 %v590, %v593
        %v596 = vld [vmem:[%s2] sm:$0xff]
        %v597 = vsub.f32 0.0, %v547
        %v598 = vmax.f32 %v597, 0.0
        %600 = vset.pattern.permute.xlu0 0
        %601 = vperm.xlu0 %600, %v596
        %v602 = vpop.permute.xlu0 %601
        %v605 = vperm.slane %v598, 0
        %v607 = vmul.f32 %v602, %v605
        %v608 = vadd.f32 %v595, %v607
        %609 = vmatpush.msra.mxu0 %v546
        %610 = vmatpush.msra.mxu0 %v545
        %611 = vmatpush.msra.mxu0 %v544
        %612 = vmatpush.msra.mxu0 %v543
        %613 = vmatpush.msra.mxu0 %v542
        %614 = vmatpush.msra.mxu0 %v541
        %615 = vmatpush.msra.mxu0 %v540
        %616 = vmatpush.msra.mxu0 %v539
        %617 = vmatpush.msra.mxu0 %v538
        %618 = vmatpush.msra.mxu0 %v537
        %619 = vmatpush.msra.mxu0 %v536
        %620 = vmatpush.msra.mxu0 %v535
        %621 = vmatpush.msra.mxu0 %v534
        %622 = vmatpush.msra.mxu0 %v533
        %623 = vmatpush.msra.mxu0 %v532
        %624 = vmatpush.msra.mxu0 %v531
        %625 = vmatmul.f32.gmra.mxu0 %v608
        %v626 = vpop.f32.mrf.mxu0
        %v627 = vadd.f32 0.0, %v626
        %628 = vdwg.mxu0
        %v629 = vadd.f32 %v557, %v583
        %v630 = vadd.f32 %v629, %v627
        %v631 = vmax.f32 %v630, 0.0
        %632 = vst [vmem:[#allocation2] sm:$0xff] %v631
        %p633 = scmp.eq.s32.totalorder %s29, 1
        // Predicated region
        $region85: #{tpu_custom_call.1} parent=67 // pred_check
          %p634 = pneg %p633
        $region86: #{tpu_custom_call.1} parent=67 // pred_check_branch
          %636 = sbr.rel (%p634) target = $region88
        $region87: #{tpu_custom_call.1} parent=67 // pred_region
          %v637 = vld [vmem:[#allocation7] sm:$0xff]
          %v638 = vld [vmem:[#allocation7 + $0x8] sm:$0xff]
          %v639 = vld [vmem:[#allocation7 + $0x10] sm:$0xff]
          %v640 = vld [vmem:[#allocation7 + $0x18] sm:$0xff]
          %v641 = vld [vmem:[#allocation7 + $0x20] sm:$0xff]
          %v642 = vld [vmem:[#allocation7 + $0x28] sm:$0xff]
          %v643 = vld [vmem:[#allocation7 + $0x30] sm:$0xff]
          %v644 = vld [vmem:[#allocation7 + $0x38] sm:$0xff]
          %v645 = vld [vmem:[#allocation7 + $0x40] sm:$0xff]
          %v646 = vld [vmem:[#allocation7 + $0x48] sm:$0xff]
          %v647 = vld [vmem:[#allocation7 + $0x50] sm:$0xff]
          %v648 = vld [vmem:[#allocation7 + $0x58] sm:$0xff]
          %v649 = vld [vmem:[#allocation7 + $0x60] sm:$0xff]
          %v650 = vld [vmem:[#allocation7 + $0x68] sm:$0xff]
          %v651 = vld [vmem:[#allocation7 + $0x70] sm:$0xff]
          %v652 = vld [vmem:[#allocation7 + $0x78] sm:$0xff]
          %653 = vmatpush.msra.mxu0 %v652
          %654 = vmatpush.msra.mxu0 %v651
          %655 = vmatpush.msra.mxu0 %v650
          %656 = vmatpush.msra.mxu0 %v649
          %657 = vmatpush.msra.mxu0 %v648
          %658 = vmatpush.msra.mxu0 %v647
          %659 = vmatpush.msra.mxu0 %v646
          %660 = vmatpush.msra.mxu0 %v645
          %661 = vmatpush.msra.mxu0 %v644
          %662 = vmatpush.msra.mxu0 %v643
          %663 = vmatpush.msra.mxu0 %v642
          %664 = vmatpush.msra.mxu0 %v641
          %665 = vmatpush.msra.mxu0 %v640
          %666 = vmatpush.msra.mxu0 %v639
          %667 = vmatpush.msra.mxu0 %v638
          %668 = vmatpush.msra.mxu0 %v637
          %669 = vmatmul.f32.gmra.mxu0 %v631
          %v670 = vpop.f32.mrf.mxu0
          %v671 = vadd.f32 0.0, %v670
          %672 = vdwg.mxu0
          %v673 = vrot.slane %v631, 4
          %v674 = vadd.f32 %v631, %v673
          %v675 = vrot.slane %v674, 2
          %v676 = vadd.f32 %v674, %v675
          %v677 = vrot.slane %v676, 1
          %v678 = vadd.f32 %v676, %v677
          %v679 = vmax.f32 %v678, 0.0
          %v680 = vld [vmem:[%s10] sm:$0x1]
          %v681 = vmul.f32 %v679, %v680
          %vm682 = vcmask 1040384
          %v683 = vsel %vm682, %v681, 0.0
          %684 = vadd.xlane.f32.xlu0 %v683
          %v685 = vpop.xlane.xlu0 %684
          %v686 = vmax.f32 %v671, 0.0
          %v687 = vld [vmem:[%s11] sm:$0x1]
          %v689 = vperm.slane %v687, 0
          %v691 = vmul.f32 %v686, %v689
          %692 = vadd.xlane.f32.xlu0 %v691
          %v693 = vpop.xlane.xlu0 %692
          %v694 = vperm.slane %v685, 0
          %v695 = vadd.f32 %v693, %v694
          %vm696 = vcmask 7168
          %697 = vst.msk [vmem:[%s12] sm:$0xff] %vm696, %v695
        $region88: #{tpu_custom_call.1} parent=67 // pred_fallthru
          _
        // Predicated region
        $region89: #{tpu_custom_call.1} parent=67 // pred_check
          %p698 = pneg %p314
        $region90: #{tpu_custom_call.1} parent=67 // pred_check_branch
          %700 = sbr.rel (%p698) target = $region92
        $region91: #{tpu_custom_call.1} parent=67 // pred_region
          _
        $region92: #{tpu_custom_call.1} parent=67 // pred_fallthru
          _
        // Predicated region
        $region93: #{tpu_custom_call.1} parent=67 // pred_check
          %p701 = pneg %p314
        $region94: #{tpu_custom_call.1} parent=67 // pred_check_branch
          %703 = sbr.rel (%p701) target = $region96
        $region95: #{tpu_custom_call.1} parent=67 // pred_region
          _
        $region96: #{tpu_custom_call.1} parent=67 // pred_fallthru
          _
      $region68: #{tpu_custom_call.1} parent=5 // pred_fallthru
        _
      %p704 = scmp.le.s32.totalorder 2, %s24
      // Predicated region
      $region97: #{tpu_custom_call.1} parent=5 // pred_check
        %p705 = pneg %p704
      $region98: #{tpu_custom_call.1} parent=5 // pred_check_branch
        %707 = sbr.rel (%p705) target = $region100
      $region99: #{tpu_custom_call.1} parent=5 // pred_region
        %s708 = ssub.s32 %s24, 2
      $region100: #{tpu_custom_call.1} parent=5 // pred_fallthru
        _
    $region6: #{tpu_custom_call.1} parent=1 // loop_footer
      %s28 = sadd.s32 1, %s24
    $region7: #{tpu_custom_call.1} parent=1 // loop_footer_branch
      %23 = sbr.rel target = $region3
    $region8: #{tpu_custom_call.1} parent=1 // loop_exit
      _
    %709 = vsyncpa [#allocation4], 1
    %s710 = scalar_lea.sflag [#allocation4], 1
    %711 = vsyncpa %s710, 1
    %712 = vsyncpa [#allocation6], 1
    %s713 = scalar_lea.sflag [#allocation6], 1
    %714 = vsyncpa %s713, 1

</llo_original>
